<compile_context>
chip_gen: v6e
topology: v6e:2x2x1
jax: 0.10.0
libtpu: 0.0.40
codegen_flags: <defaults>
</compile_context>

<pallas_src>
import functools

import jax
import jax.numpy as jnp
from jax.experimental import pallas as pl
from jax.experimental.pallas import tpu as pltpu


def _round_up(n, m):
    return ((n + m - 1) // m) * m


def _vmem_budget_bytes():
    """~75% of physical VMEM (generation-aware); conservative fallback."""
    try:
        cap = int(pltpu.get_tpu_info().vmem_capacity_bytes)
    except Exception:
        cap = 64 << 20  # assume the smallest (v7x-sized) VMEM
    return int(0.75 * cap)


def _autoencoder_kernel(x_ref, w1_ref, b1_ref, w2_ref, b2_ref, o_ref):
    # encoder: Linear + ReLU (MXU matmul, f32 accumulate, f32 activation math)
    x = x_ref[...]
    h = jnp.dot(x, w1_ref[...], preferred_element_type=jnp.float32)
    h = jnp.maximum(h + b1_ref[...].astype(jnp.float32), 0.0)

    # decoder: Linear + Sigmoid (cast ReLU output back to the MXU dtype)
    y = jnp.dot(h.astype(w2_ref.dtype), w2_ref[...],
                preferred_element_type=jnp.float32)
    y = y + b2_ref[...].astype(jnp.float32)
    # Exact sigmoid: kernel is memory-bound, so EUP exp + exact divide is free.
    y = 1.0 / (1.0 + jnp.exp(-y))

    o_ref[...] = y.astype(o_ref.dtype)


@functools.partial(jax.jit,
                   static_argnames=("block_b", "single_buffer_weights"))
def _forward_impl(x, w1_p, b1_p, w2_p, b2_p, *, block_b, single_buffer_weights):
    B, D = x.shape
    out_dtype = x.dtype
    D_pad, H_pad = w1_p.shape
    compute_dtype = w1_p.dtype
    cd_bytes = w1_p.dtype.itemsize
    out_bytes_per = jnp.dtype(out_dtype).itemsize

    # --- batch tile: sublane-aligned, aim for >= 4 grid steps (megacore) ----
    sub = {4: 8, 2: 16, 1: 32}.get(cd_bytes, 8)
    desired_steps = 4
    bb = min(block_b, _round_up(pl.cdiv(B, desired_steps), sub))
    bb = max(sub, _round_up(bb, sub))

    # --- shrink bb until the pipeline footprint fits this chip's VMEM -------
    vmem_budget = _vmem_budget_bytes()
    w_bufs = 1 if single_buffer_weights else 2
    w_bytes = w_bufs * ((D_pad * H_pad + H_pad * D_pad) * cd_bytes
                        + (H_pad + D_pad) * b1_p.dtype.itemsize)
    # TODO(synk): if w_bytes ever exceeds ~24-32 MiB (huge D/H on v7x), stream
    # weight tiles via a K/N grid axis instead of keeping them resident.

    def footprint(bb_):
        x_tile = 2 * bb_ * D_pad * cd_bytes        # double-buffered input
        o_tile = 2 * bb_ * D_pad * out_bytes_per   # double-buffered output
        act = bb_ * (H_pad + D_pad) * 4            # f32 h / y intermediates
        return x_tile + o_tile + act + w_bytes

    while bb > sub and footprint(bb) > vmem_budget:
        bb = max(sub, _round_up(bb // 2, sub))

    B_pad = _round_up(B, bb)
    vmem_limit = min(vmem_budget,
                     max(16 << 20, int(1.25 * footprint(bb)) + (4 << 20)))

    # --- pad/cast x only when needed (weights were padded once, outside) ----
    x_c = x.astype(compute_dtype) if x.dtype != compute_dtype else x
    if (B_pad != B) or (D_pad != D):
        x_c = jnp.pad(x_c, ((0, B_pad - B), (0, D_pad - D)))

    resident = ({"pipeline_mode": pl.Buffered(1)}
                if single_buffer_weights else {})

    out_p = pl.pallas_call(
        _autoencoder_kernel,
        out_shape=jax.ShapeDtypeStruct((B_pad, D_pad), out_dtype),
        grid_spec=pltpu.PrefetchScalarGridSpec(
            num_scalar_prefetch=0,
            grid=(B_pad // bb,),
            in_specs=[
                pl.BlockSpec((bb, D_pad), lambda i: (i, 0)),                 # x tile
                pl.BlockSpec((D_pad, H_pad), lambda i: (0, 0), **resident),  # enc W
                pl.BlockSpec((1, H_pad), lambda i: (0, 0), **resident),      # enc b
                pl.BlockSpec((H_pad, D_pad), lambda i: (0, 0), **resident),  # dec W
                pl.BlockSpec((1, D_pad), lambda i: (0, 0), **resident),      # dec b
            ],
            out_specs=pl.BlockSpec((bb, D_pad), lambda i: (i, 0)),
        ),
        compiler_params=pltpu.CompilerParams(
            dimension_semantics=("parallel",),
            vmem_limit_bytes=vmem_limit,
        ),
    )(x_c, w1_p, b1_p, w2_p, b2_p)

    if (B_pad != B) or (D_pad != D):
        out_p = out_p[:B, :D]
    return out_p


def make_autoencoder(w1, b1, w2, b2, *, compute_dtype=jnp.bfloat16,
                     block_b=512):
    """Build a forward fn. w1: [D,H], b1: [1,H]|[H], w2: [H,D], b2: [1,D]|[D].

    Weights are stored [in_features, out_features] so the kernel does x @ W.
    Padding + bf16 cast of the weights happens once here (not per call).
    Zero padding is semantically inert: padded input columns hit zero weight
    rows, padded hidden units are ReLU(0)=0 feeding zero decoder rows, and
    padded output columns are sliced off.
    """
    D, H = w1.shape
    D_pad, H_pad = _round_up(D, 128), _round_up(H, 128)

    w1_p = jnp.pad(w1, ((0, D_pad - D), (0, H_pad - H))).astype(compute_dtype)
    b1_p = jnp.pad(jnp.reshape(b1, (1, -1)), ((0, 0), (0, H_pad - H)))
    w2_p = jnp.pad(w2, ((0, H_pad - H), (0, D_pad - D))).astype(compute_dtype)
    b2_p = jnp.pad(jnp.reshape(b2, (1, -1)), ((0, 0), (0, D_pad - D)))

    def forward(x):
        try:
            return _forward_impl(x, w1_p, b1_p, w2_p, b2_p,
                                 block_b=block_b, single_buffer_weights=True)
        except Exception:
            # Fallback if this JAX build rejects single-buffered BlockSpecs.
            return _forward_impl(x, w1_p, b1_p, w2_p, b2_p,
                                 block_b=block_b, single_buffer_weights=False)

    return forward


def init_params(key, input_size, hidden_size):
    """Deterministic init mirroring nn.Linear's U(-1/sqrt(fan_in), 1/sqrt(fan_in))."""
    k1, k2, k3, k4 = jax.random.split(key, 4)
    bound1 = 1.0 / jnp.sqrt(jnp.float32(input_size))
    bound2 = 1.0 / jnp.sqrt(jnp.float32(hidden_size))
    # PyTorch stores weight as [out, in]; we keep it as [in, out] for x @ W.
    w1 = jax.random.uniform(k1, (input_size, hidden_size), jnp.float32,
                            -bound1, bound1)
    b1 = jax.random.uniform(k2, (1, hidden_size), jnp.float32, -bound1, bound1)
    w2 = jax.random.uniform(k3, (hidden_size, input_size), jnp.float32,
                            -bound2, bound2)
    b2 = jax.random.uniform(k4, (1, input_size), jnp.float32, -bound2, bound2)
    return w1, b1, w2, b2


def reference_forward(x, w1, b1, w2, b2):
    h = jnp.maximum(x @ w1 + b1, 0.0)
    return jax.nn.sigmoid(h @ w2 + b2)


if __name__ == "__main__":
    key = jax.random.PRNGKey(0)
    kx, kp = jax.random.split(key)

    batch = 8
    input_size = 16
    hidden_size = 3  # module default

    x = jax.random.normal(kx, (batch, input_size), jnp.float32)
    w1, b1, w2, b2 = init_params(kp, input_size, hidden_size)

    forward = make_autoencoder(w1, b1, w2, b2)
    out = jax.block_until_ready(forward(x))

    ref = reference_forward(x, w1, b1, w2, b2)
    assert out.shape == (batch, input_size)
    # bf16 MXU operands (f32 accumulate) -> allow ~1e-2-scale slack vs the
    # pure-f32 reference; sigmoid compresses the error well below this.
    err = float(jnp.max(jnp.abs(out.astype(jnp.float32) - ref)))
    assert err < 2e-2, f"max abs err {err}"

    print("KERNEL_OK")
</pallas_src>

<mosaic_0001>
module attributes {stable_mosaic.version = 11 : i64} {
  func.func @_autoencoder_kernel(%arg0: i32, %arg1: memref<16x128xbf16, #tpu.memory_space<vmem>>, %arg2: memref<128x128xbf16, #tpu.memory_space<vmem>>, %arg3: memref<1x128xf32, #tpu.memory_space<vmem>>, %arg4: memref<128x128xbf16, #tpu.memory_space<vmem>>, %arg5: memref<1x128xf32, #tpu.memory_space<vmem>>, %arg6: memref<16x128xf32, #tpu.memory_space<vmem>>) attributes {dimension_semantics = [#tpu.dimension_semantics<parallel>], iteration_bounds = array<i64: 1>, scalar_prefetch = 0 : i64, scratch_operands = 0 : i64, tpu.core_type = #tpu.core_type<tc>, window_params = [{transform_indices = @transform_0, window_bounds = array<i64: 16, 128>}, {pipeline_mode = #tpu.pipeline_mode<synchronous>, transform_indices = @transform_1, window_bounds = array<i64: 128, 128>}, {pipeline_mode = #tpu.pipeline_mode<synchronous>, transform_indices = @transform_2, window_bounds = array<i64: 1, 128>}, {pipeline_mode = #tpu.pipeline_mode<synchronous>, transform_indices = @transform_3, window_bounds = array<i64: 128, 128>}, {pipeline_mode = #tpu.pipeline_mode<synchronous>, transform_indices = @transform_4, window_bounds = array<i64: 1, 128>}, {transform_indices = @transform_5, window_bounds = array<i64: 16, 128>}]} {
    %c0 = arith.constant 0 : index
    %c0_0 = arith.constant 0 : index
    %0 = vector.load %arg1[%c0, %c0_0] : memref<16x128xbf16, #tpu.memory_space<vmem>>, vector<16x128xbf16>
    %c0_1 = arith.constant 0 : index
    %c0_2 = arith.constant 0 : index
    %1 = vector.load %arg2[%c0_1, %c0_2] : memref<128x128xbf16, #tpu.memory_space<vmem>>, vector<128x128xbf16>
    %cst = arith.constant dense<0.000000e+00> : vector<16x128xf32>
    %2 = tpu.matmul %0, %1, %cst {dimension_numbers = #tpu.dot_dimension_numbers<[1], [0], [0], [1], [0, 0, 1, 1], [], []>} : vector<16x128xbf16>, vector<128x128xbf16>, vector<16x128xf32> -> vector<16x128xf32>
    %c0_3 = arith.constant 0 : index
    %c0_4 = arith.constant 0 : index
    %3 = vector.load %arg3[%c0_3, %c0_4] : memref<1x128xf32, #tpu.memory_space<vmem>>, vector<1x128xf32>
    %4 = vector.broadcast %3 : vector<1x128xf32> to vector<16x128xf32>
    %5 = arith.addf %2, %4 : vector<16x128xf32>
    %cst_5 = arith.constant 0.000000e+00 : f32
    %6 = vector.broadcast %cst_5 : f32 to vector<16x128xf32>
    %7 = arith.maximumf %5, %6 : vector<16x128xf32>
    %8 = arith.truncf %7 : vector<16x128xf32> to vector<16x128xbf16>
    %c0_6 = arith.constant 0 : index
    %c0_7 = arith.constant 0 : index
    %9 = vector.load %arg4[%c0_6, %c0_7] : memref<128x128xbf16, #tpu.memory_space<vmem>>, vector<128x128xbf16>
    %cst_8 = arith.constant dense<0.000000e+00> : vector<16x128xf32>
    %10 = tpu.matmul %8, %9, %cst_8 {dimension_numbers = #tpu.dot_dimension_numbers<[1], [0], [0], [1], [0, 0, 1, 1], [], []>} : vector<16x128xbf16>, vector<128x128xbf16>, vector<16x128xf32> -> vector<16x128xf32>
    %c0_9 = arith.constant 0 : index
    %c0_10 = arith.constant 0 : index
    %11 = vector.load %arg5[%c0_9, %c0_10] : memref<1x128xf32, #tpu.memory_space<vmem>>, vector<1x128xf32>
    %12 = vector.broadcast %11 : vector<1x128xf32> to vector<16x128xf32>
    %13 = arith.addf %10, %12 : vector<16x128xf32>
    %cst_11 = arith.constant 0.000000e+00 : f32
    %14 = vector.broadcast %cst_11 : f32 to vector<16x128xf32>
    %15 = arith.subf %14, %13 : vector<16x128xf32>
    %16 = math.exp %15 : vector<16x128xf32>
    %cst_12 = arith.constant 1.000000e+00 : f32
    %17 = vector.broadcast %cst_12 : f32 to vector<16x128xf32>
    %18 = arith.addf %17, %16 : vector<16x128xf32>
    %cst_13 = arith.constant 1.000000e+00 : f32
    %19 = vector.broadcast %cst_13 : f32 to vector<16x128xf32>
    %20 = arith.divf %19, %18 : vector<16x128xf32>
    %c0_14 = arith.constant 0 : index
    %c0_15 = arith.constant 0 : index
    %21 = vector.load %arg6[%c0_14, %c0_15] : memref<16x128xf32, #tpu.memory_space<vmem>>, vector<16x128xf32>
    tpu.vector_store %arg6[%c0_14, %c0_15], %20 {strides = array<i32>} : memref<16x128xf32, #tpu.memory_space<vmem>>, vector<16x128xf32>,
    return
  }
  func.func @transform_0(%arg0: i32) -> (i32, i32) {
    %c0_i32 = arith.constant 0 : i32
    %c0_i32_0 = arith.constant 0 : i32
    return %arg0, %c0_i32 : i32, i32
  }
  func.func @transform_1(%arg0: i32) -> (i32, i32) {
    %c0_i32 = arith.constant 0 : i32
    %c0_i32_0 = arith.constant 0 : i32
    %c0_i32_1 = arith.constant 0 : i32
    return %c0_i32, %c0_i32_0 : i32, i32
  }
  func.func @transform_2(%arg0: i32) -> (i32, i32) {
    %c0_i32 = arith.constant 0 : i32
    %c0_i32_0 = arith.constant 0 : i32
    %c0_i32_1 = arith.constant 0 : i32
    return %c0_i32, %c0_i32_0 : i32, i32
  }
  func.func @transform_3(%arg0: i32) -> (i32, i32) {
    %c0_i32 = arith.constant 0 : i32
    %c0_i32_0 = arith.constant 0 : i32
    %c0_i32_1 = arith.constant 0 : i32
    return %c0_i32, %c0_i32_0 : i32, i32
  }
  func.func @transform_4(%arg0: i32) -> (i32, i32) {
    %c0_i32 = arith.constant 0 : i32
    %c0_i32_0 = arith.constant 0 : i32
    %c0_i32_1 = arith.constant 0 : i32
    return %c0_i32, %c0_i32_0 : i32, i32
  }
  func.func @transform_5(%arg0: i32) -> (i32, i32) {
    %c0_i32 = arith.constant 0 : i32
    %c0_i32_0 = arith.constant 0 : i32
    return %arg0, %c0_i32 : i32, i32
  }
}

module attributes {stable_mosaic.version = 11 : i64} {
  func.func @_autoencoder_kernel(%arg0: i32, %arg1: memref<16x128xbf16, #tpu.memory_space<vmem>>, %arg2: memref<128x128xbf16, #tpu.memory_space<vmem>>, %arg3: memref<1x128xf32, #tpu.memory_space<vmem>>, %arg4: memref<128x128xbf16, #tpu.memory_space<vmem>>, %arg5: memref<1x128xf32, #tpu.memory_space<vmem>>, %arg6: memref<16x128xf32, #tpu.memory_space<vmem>>) attributes {dimension_semantics = [#tpu.dimension_semantics<parallel>], iteration_bounds = array<i64: 1>, scalar_prefetch = 0 : i64, scratch_operands = 0 : i64, tpu.core_type = #tpu.core_type<tc>, window_params = [{transform_indices = @transform_0, window_bounds = array<i64: 16, 128>}, {pipeline_mode = #tpu.pipeline_mode<synchronous>, transform_indices = @transform_1, window_bounds = array<i64: 128, 128>}, {pipeline_mode = #tpu.pipeline_mode<synchronous>, transform_indices = @transform_2, window_bounds = array<i64: 1, 128>}, {pipeline_mode = #tpu.pipeline_mode<synchronous>, transform_indices = @transform_3, window_bounds = array<i64: 128, 128>}, {pipeline_mode = #tpu.pipeline_mode<synchronous>, transform_indices = @transform_4, window_bounds = array<i64: 1, 128>}, {transform_indices = @transform_5, window_bounds = array<i64: 16, 128>}]} {
    %c0 = arith.constant 0 : index
    %c0_0 = arith.constant 0 : index
    %0 = vector.load %arg1[%c0, %c0_0] : memref<16x128xbf16, #tpu.memory_space<vmem>>, vector<16x128xbf16>
    %c0_1 = arith.constant 0 : index
    %c0_2 = arith.constant 0 : index
    %1 = vector.load %arg2[%c0_1, %c0_2] : memref<128x128xbf16, #tpu.memory_space<vmem>>, vector<128x128xbf16>
    %cst = arith.constant dense<0.000000e+00> : vector<16x128xf32>
    %2 = tpu.matmul %0, %1, %cst {dimension_numbers = #tpu.dot_dimension_numbers<[1], [0], [0], [1], [0, 0, 1, 1], [], []>} : vector<16x128xbf16>, vector<128x128xbf16>, vector<16x128xf32> -> vector<16x128xf32>
    %c0_3 = arith.constant 0 : index
    %c0_4 = arith.constant 0 : index
    %3 = vector.load %arg3[%c0_3, %c0_4] : memref<1x128xf32, #tpu.memory_space<vmem>>, vector<1x128xf32>
    %4 = vector.broadcast %3 : vector<1x128xf32> to vector<16x128xf32>
    %5 = arith.addf %2, %4 : vector<16x128xf32>
    %cst_5 = arith.constant 0.000000e+00 : f32
    %6 = vector.broadcast %cst_5 : f32 to vector<16x128xf32>
    %7 = arith.maximumf %5, %6 : vector<16x128xf32>
    %8 = arith.truncf %7 : vector<16x128xf32> to vector<16x128xbf16>
    %c0_6 = arith.constant 0 : index
    %c0_7 = arith.constant 0 : index
    %9 = vector.load %arg4[%c0_6, %c0_7] : memref<128x128xbf16, #tpu.memory_space<vmem>>, vector<128x128xbf16>
    %cst_8 = arith.constant dense<0.000000e+00> : vector<16x128xf32>
    %10 = tpu.matmul %8, %9, %cst_8 {dimension_numbers = #tpu.dot_dimension_numbers<[1], [0], [0], [1], [0, 0, 1, 1], [], []>} : vector<16x128xbf16>, vector<128x128xbf16>, vector<16x128xf32> -> vector<16x128xf32>
    %c0_9 = arith.constant 0 : index
    %c0_10 = arith.constant 0 : index
    %11 = vector.load %arg5[%c0_9, %c0_10] : memref<1x128xf32, #tpu.memory_space<vmem>>, vector<1x128xf32>
    %12 = vector.broadcast %11 : vector<1x128xf32> to vector<16x128xf32>
    %13 = arith.addf %10, %12 : vector<16x128xf32>
    %cst_11 = arith.constant 0.000000e+00 : f32
    %14 = vector.broadcast %cst_11 : f32 to vector<16x128xf32>
    %15 = arith.subf %14, %13 : vector<16x128xf32>
    %16 = math.exp %15 : vector<16x128xf32>
    %cst_12 = arith.constant 1.000000e+00 : f32
    %17 = vector.broadcast %cst_12 : f32 to vector<16x128xf32>
    %18 = arith.addf %17, %16 : vector<16x128xf32>
    %cst_13 = arith.constant 1.000000e+00 : f32
    %19 = vector.broadcast %cst_13 : f32 to vector<16x128xf32>
    %20 = arith.divf %19, %18 : vector<16x128xf32>
    %c0_14 = arith.constant 0 : index
    %c0_15 = arith.constant 0 : index
    %21 = vector.load %arg6[%c0_14, %c0_15] : memref<16x128xf32, #tpu.memory_space<vmem>>, vector<16x128xf32>
    tpu.vector_store %arg6[%c0_14, %c0_15], %20 {strides = array<i32>} : memref<16x128xf32, #tpu.memory_space<vmem>>, vector<16x128xf32>,
    return
  }
  func.func @transform_0(%arg0: i32) -> (i32, i32) {
    %c0_i32 = arith.constant 0 : i32
    %c0_i32_0 = arith.constant 0 : i32
    return %arg0, %c0_i32 : i32, i32
  }
  func.func @transform_1(%arg0: i32) -> (i32, i32) {
    %c0_i32 = arith.constant 0 : i32
    %c0_i32_0 = arith.constant 0 : i32
    %c0_i32_1 = arith.constant 0 : i32
    return %c0_i32, %c0_i32_0 : i32, i32
  }
  func.func @transform_2(%arg0: i32) -> (i32, i32) {
    %c0_i32 = arith.constant 0 : i32
    %c0_i32_0 = arith.constant 0 : i32
    %c0_i32_1 = arith.constant 0 : i32
    return %c0_i32, %c0_i32_0 : i32, i32
  }
  func.func @transform_3(%arg0: i32) -> (i32, i32) {
    %c0_i32 = arith.constant 0 : i32
    %c0_i32_0 = arith.constant 0 : i32
    %c0_i32_1 = arith.constant 0 : i32
    return %c0_i32, %c0_i32_0 : i32, i32
  }
  func.func @transform_4(%arg0: i32) -> (i32, i32) {
    %c0_i32 = arith.constant 0 : i32
    %c0_i32_0 = arith.constant 0 : i32
    %c0_i32_1 = arith.constant 0 : i32
    return %c0_i32, %c0_i32_0 : i32, i32
  }
  func.func @transform_5(%arg0: i32) -> (i32, i32) {
    %c0_i32 = arith.constant 0 : i32
    %c0_i32_0 = arith.constant 0 : i32
    return %arg0, %c0_i32 : i32, i32
  }
}

</mosaic_0001>

<llo_original>
// kernel: _forward_impl.1
$region0: #{_forward_impl.1}
  #allocation0 [shape = 'u32[]', space=smem, size = 0x4, offset = 0x4, fixed_abs, tag = 'smem constant byte address 0x4 - core index']
  #allocation1 [shape = 'u32[144,128]{1,0:T(1,128)}', space=vmem, size = 0x12000, scoped, tag = 'internal scratch']
  %s0 = inlined_call_operand.vmem [shape: bf16[16,128], index: 0, kind: input, shape index: {}]
  %s1 = inlined_call_operand.hbm [shape: bf16[128,128], index: 1, kind: input, shape index: {}]
  %s2 = inlined_call_operand.vmem [shape: f32[1,128], index: 2, kind: input, shape index: {}]
  %s3 = inlined_call_operand.hbm [shape: bf16[128,128], index: 3, kind: input, shape index: {}]
  %s4 = inlined_call_operand.vmem [shape: f32[1,128], index: 4, kind: input, shape index: {}]
  %s5 = inlined_call_operand.vmem [shape: f32[16,128], index: 5, kind: output, shape index: {}]
  %s6 = sld [smem:[#allocation0]]
  $region38: #{_forward_impl.1} parent=0
    _
  %s8 = ssub.s32 1, %s6
  %s9 = scalar_select 0, %s8, %s6
  $region1: #{_forward_impl.1} parent=0
    #allocation2 [shape = 'u8[32768]{0}', space=vmem, size = 0x8000, scoped, tag = 'input window, operand 1, single buffered']
    #allocation3 [shape = 's32[1]{0}', space=sflag, size = 0x4, scoped, tag = 'scoped memory for _forward_impl.1']
    #allocation4 [shape = 'u8[32768]{0}', space=vmem, size = 0x8000, scoped, tag = 'input window, operand 3, single buffered']
    #allocation5 [shape = 's32[1]{0}', space=sflag, size = 0x4, scoped, tag = 'scoped memory for _forward_impl.1']
    %10 = vsyncpa [#allocation3], 0
    %11 = vsyncpa [#allocation5], 0
    // Predicated region
    $region2: #{_forward_impl.1} parent=1 // pred_check
      _
    $region3: #{_forward_impl.1} parent=1 // pred_check_branch
      %13 = sbr.rel (0) target = $region5
    $region4: #{_forward_impl.1} parent=1 // pred_region
      _
    $region5: #{_forward_impl.1} parent=1 // pred_fallthru
      _
    // Predicated region
    $region6: #{_forward_impl.1} parent=1 // pred_check
      _
    $region7: #{_forward_impl.1} parent=1 // pred_check_branch
      %15 = sbr.rel (0) target = $region9
    $region8: #{_forward_impl.1} parent=1 // pred_region
      %s17 = ssub.s32 1024, 1024
      %18 = vsyncadd [#allocation3], %s17
      %s19 = sshll.u32 [#allocation2], 4
      %s20 = int_to_ptr.vmem [resolvable:$true] %s19
      %25 = dma.hbm_to_vmem [thread:$0]  %s1, 1024, %s20, [#allocation3], 64, 64, 4
    $region9: #{_forward_impl.1} parent=1 // pred_fallthru
      _
    // Predicated region
    $region10: #{_forward_impl.1} parent=1 // pred_check
      _
    $region11: #{_forward_impl.1} parent=1 // pred_check_branch
      %27 = sbr.rel (0) target = $region13
    $region12: #{_forward_impl.1} parent=1 // pred_region
      _
    $region13: #{_forward_impl.1} parent=1 // pred_fallthru
      _
    // Predicated region
    $region14: #{_forward_impl.1} parent=1 // pred_check
      _
    $region15: #{_forward_impl.1} parent=1 // pred_check_branch
      %29 = sbr.rel (0) target = $region17
    $region16: #{_forward_impl.1} parent=1 // pred_region
      %s31 = ssub.s32 1024, 1024
      %32 = vsyncadd [#allocation5], %s31
      %s33 = sshll.u32 [#allocation4], 4
      %s34 = int_to_ptr.vmem [resolvable:$true] %s33
      %39 = dma.hbm_to_vmem [thread:$0]  %s3, 1024, %s34, [#allocation5], 64, 64, 4
    $region17: #{_forward_impl.1} parent=1 // pred_fallthru
      _
    // Predicated region
    $region18: #{_forward_impl.1} parent=1 // pred_check
      _
    $region19: #{_forward_impl.1} parent=1 // pred_check_branch
      %41 = sbr.rel (0) target = $region21
    $region20: #{_forward_impl.1} parent=1 // pred_region
      _
    $region21: #{_forward_impl.1} parent=1 // pred_fallthru
      _
    // Predicated region
    $region22: #{_forward_impl.1} parent=1 // pred_check
      _
    $region23: #{_forward_impl.1} parent=1 // pred_check_branch
      %43 = sbr.rel (0) target = $region25
    $region24: #{_forward_impl.1} parent=1 // pred_region
      %44 = dma.done [#allocation3], 1024
    $region25: #{_forward_impl.1} parent=1 // pred_fallthru
      _
    // Predicated region
    $region26: #{_forward_impl.1} parent=1 // pred_check
      _
    $region27: #{_forward_impl.1} parent=1 // pred_check_branch
      %46 = sbr.rel (0) target = $region29
    $region28: #{_forward_impl.1} parent=1 // pred_region
      %47 = dma.done [#allocation5], 1024
    $region29: #{_forward_impl.1} parent=1 // pred_fallthru
      _
    %v49 = vld [vmem:[%s0] sm:$0xf]
    %v50 = vld [vmem:[%s0 + $0x4] sm:$0xf]
    %v51 = vld [vmem:[#allocation2] sm:$0xf]
    %v52 = vld [vmem:[#allocation2 + $0x4] sm:$0xf]
    %v53 = vld [vmem:[#allocation2 + $0x8] sm:$0xf]
    %v54 = vld [vmem:[#allocation2 + $0xc] sm:$0xf]
    %v55 = vld [vmem:[#allocation2 + $0x10] sm:$0xf]
    %v56 = vld [vmem:[#allocation2 + $0x14] sm:$0xf]
    %v57 = vld [vmem:[#allocation2 + $0x18] sm:$0xf]
    %v58 = vld [vmem:[#allocation2 + $0x1c] sm:$0xf]
    %v59 = vld [vmem:[#allocation2 + $0x20] sm:$0xf]
    %v60 = vld [vmem:[#allocation2 + $0x24] sm:$0xf]
    %v61 = vld [vmem:[#allocation2 + $0x28] sm:$0xf]
    %v62 = vld [vmem:[#allocation2 + $0x2c] sm:$0xf]
    %v63 = vld [vmem:[#allocation2 + $0x30] sm:$0xf]
    %v64 = vld [vmem:[#allocation2 + $0x34] sm:$0xf]
    %v65 = vld [vmem:[#allocation2 + $0x38] sm:$0xf]
    %v66 = vld [vmem:[#allocation2 + $0x3c] sm:$0xf]
    %v67 = vld [vmem:[%s2] sm:$0x1]
    %v69 = vlaneseq
    %v70 = vshrl.u32 %v69, 7
    %v71 = vsub.s32 0, %v70
    %v72 = vrot.slane %v67, %v71
    %v76 = vunpack.c.l.b16 %v49
    %v77 = vunpack.c.l.b16 %v50
    %v78 = vpack.c.b16 %v77, %v76
    %v96 = vunpack.c.l.b16 %v51
    %v97 = vunpack.c.l.b16 %v52
    %v98 = vunpack.c.l.b16 %v53
    %v99 = vunpack.c.l.b16 %v54
    %v100 = vunpack.c.l.b16 %v55
    %v101 = vunpack.c.l.b16 %v56
    %v102 = vunpack.c.l.b16 %v57
    %v103 = vunpack.c.l.b16 %v58
    %v104 = vunpack.c.l.b16 %v59
    %v105 = vunpack.c.l.b16 %v60
    %v106 = vunpack.c.l.b16 %v61
    %v107 = vunpack.c.l.b16 %v62
    %v108 = vunpack.c.l.b16 %v63
    %v109 = vunpack.c.l.b16 %v64
    %v110 = vunpack.c.l.b16 %v65
    %v111 = vunpack.c.l.b16 %v66
    %v112 = vpack.c.b16 %v97, %v96
    %v113 = vpack.c.b16 %v99, %v98
    %v114 = vpack.c.b16 %v101, %v100
    %v115 = vpack.c.b16 %v103, %v102
    %v116 = vpack.c.b16 %v105, %v104
    %v117 = vpack.c.b16 %v107, %v106
    %v118 = vpack.c.b16 %v109, %v108
    %v119 = vpack.c.b16 %v111, %v110
    %128 = vmatprep.subr.bf16.mxu0 0
    %129 = vmatpush1.bf16.msra.mxu0 %v119
    %130 = vmatprep.subr.bf16.mxu0 0
    %131 = vmatpush1.bf16.msra.mxu0 %v118
    %132 = vmatprep.subr.bf16.mxu0 0
    %133 = vmatpush1.bf16.msra.mxu0 %v117
    %134 = vmatprep.subr.bf16.mxu0 0
    %135 = vmatpush1.bf16.msra.mxu0 %v116
    %136 = vmatprep.subr.bf16.mxu0 0
    %137 = vmatpush1.bf16.msra.mxu0 %v115
    %138 = vmatprep.subr.bf16.mxu0 0
    %139 = vmatpush1.bf16.msra.mxu0 %v114
    %140 = vmatprep.subr.bf16.mxu0 0
    %141 = vmatpush1.bf16.msra.mxu0 %v113
    %142 = vmatprep.subr.bf16.mxu0 0
    %143 = vmatpush1.bf16.msra.mxu0 %v112
    %144 = vmatprep.subr.bf16.mxu0 0
    %145 = vmatpush2.bf16.msra.mxu0 0
    %146 = vmatprep.subr.bf16.mxu0 0
    %147 = vmatpush2.bf16.msra.mxu0 0
    %148 = vmatprep.subr.bf16.mxu0 0
    %149 = vmatpush2.bf16.msra.mxu0 0
    %150 = vmatprep.subr.bf16.mxu0 0
    %151 = vmatpush2.bf16.msra.mxu0 0
    %152 = vmatprep.subr.bf16.mxu0 0
    %153 = vmatpush2.bf16.msra.mxu0 0
    %154 = vmatprep.subr.bf16.mxu0 0
    %155 = vmatpush2.bf16.msra.mxu0 0
    %156 = vmatprep.subr.bf16.mxu0 0
    %157 = vmatpush2.bf16.msra.mxu0 0
    %158 = vmatprep.subr.bf16.mxu0 0
    %159 = vmatpush2.bf16.msra.mxu0 0
    %160 = vmatprep.mubr.bf16.mxu0 0
    %161 = vmatmul.mubr.bf16.gmra.mxu0 %v78
    %v162 = vpop.f32.mrf.mxu0
    %v163 = vadd.f32 %v72, %v162
    %v164 = vpop.f32.mrf.mxu0
    %v165 = vpop.f32.mrf.mxu0
    %v166 = vadd.f32 %v72, %v165
    %v167 = vpop.f32.mrf.mxu0
    %168 = vdwg.mxu0
    %v169 = vmax.f32 %v163, 0.0
    %v170 = vmax.f32 %v166, 0.0
    %v171 = vpack.c.bf16 %v170, %v169
    %v172 = vld [vmem:[#allocation4] sm:$0xf]
    %v173 = vld [vmem:[#allocation4 + $0x4] sm:$0xf]
    %v174 = vld [vmem:[#allocation4 + $0x8] sm:$0xf]
    %v175 = vld [vmem:[#allocation4 + $0xc] sm:$0xf]
    %v176 = vld [vmem:[#allocation4 + $0x10] sm:$0xf]
    %v177 = vld [vmem:[#allocation4 + $0x14] sm:$0xf]
    %v178 = vld [vmem:[#allocation4 + $0x18] sm:$0xf]
    %v179 = vld [vmem:[#allocation4 + $0x1c] sm:$0xf]
    %v180 = vld [vmem:[#allocation4 + $0x20] sm:$0xf]
    %v181 = vld [vmem:[#allocation4 + $0x24] sm:$0xf]
    %v182 = vld [vmem:[#allocation4 + $0x28] sm:$0xf]
    %v183 = vld [vmem:[#allocation4 + $0x2c] sm:$0xf]
    %v184 = vld [vmem:[#allocation4 + $0x30] sm:$0xf]
    %v185 = vld [vmem:[#allocation4 + $0x34] sm:$0xf]
    %v186 = vld [vmem:[#allocation4 + $0x38] sm:$0xf]
    %v187 = vld [vmem:[#allocation4 + $0x3c] sm:$0xf]
    %v188 = vld [vmem:[%s4] sm:$0x1]
    %v190 = vlaneseq
    %v191 = vshrl.u32 %v190, 7
    %v192 = vsub.s32 0, %v191
    %v193 = vrot.slane %v188, %v192
    %v211 = vunpack.c.l.b16 %v172
    %v212 = vunpack.c.l.b16 %v173
    %v213 = vunpack.c.l.b16 %v174
    %v214 = vunpack.c.l.b16 %v175
    %v215 = vunpack.c.l.b16 %v176
    %v216 = vunpack.c.l.b16 %v177
    %v217 = vunpack.c.l.b16 %v178
    %v218 = vunpack.c.l.b16 %v179
    %v219 = vunpack.c.l.b16 %v180
    %v220 = vunpack.c.l.b16 %v181
    %v221 = vunpack.c.l.b16 %v182
    %v222 = vunpack.c.l.b16 %v183
    %v223 = vunpack.c.l.b16 %v184
    %v224 = vunpack.c.l.b16 %v185
    %v225 = vunpack.c.l.b16 %v186
    %v226 = vunpack.c.l.b16 %v187
    %v227 = vpack.c.b16 %v212, %v211
    %v228 = vpack.c.b16 %v214, %v213
    %v229 = vpack.c.b16 %v216, %v215
    %v230 = vpack.c.b16 %v218, %v217
    %v231 = vpack.c.b16 %v220, %v219
    %v232 = vpack.c.b16 %v222, %v221
    %v233 = vpack.c.b16 %v224, %v223
    %v234 = vpack.c.b16 %v226, %v225
    %243 = vmatprep.subr.bf16.mxu0 0
    %244 = vmatpush1.bf16.msra.mxu0 %v234
    %245 = vmatprep.subr.bf16.mxu0 0
    %246 = vmatpush1.bf16.msra.mxu0 %v233
    %247 = vmatprep.subr.bf16.mxu0 0
    %248 = vmatpush1.bf16.msra.mxu0 %v232
    %249 = vmatprep.subr.bf16.mxu0 0
    %250 = vmatpush1.bf16.msra.mxu0 %v231
    %251 = vmatprep.subr.bf16.mxu0 0
    %252 = vmatpush1.bf16.msra.mxu0 %v230
    %253 = vmatprep.subr.bf16.mxu0 0
    %254 = vmatpush1.bf16.msra.mxu0 %v229
    %255 = vmatprep.subr.bf16.mxu0 0
    %256 = vmatpush1.bf16.msra.mxu0 %v228
    %257 = vmatprep.subr.bf16.mxu0 0
    %258 = vmatpush1.bf16.msra.mxu0 %v227
    %259 = vmatprep.subr.bf16.mxu0 0
    %260 = vmatpush2.bf16.msra.mxu0 0
    %261 = vmatprep.subr.bf16.mxu0 0
    %262 = vmatpush2.bf16.msra.mxu0 0
    %263 = vmatprep.subr.bf16.mxu0 0
    %264 = vmatpush2.bf16.msra.mxu0 0
    %265 = vmatprep.subr.bf16.mxu0 0
    %266 = vmatpush2.bf16.msra.mxu0 0
    %267 = vmatprep.subr.bf16.mxu0 0
    %268 = vmatpush2.bf16.msra.mxu0 0
    %269 = vmatprep.subr.bf16.mxu0 0
    %270 = vmatpush2.bf16.msra.mxu0 0
    %271 = vmatprep.subr.bf16.mxu0 0
    %272 = vmatpush2.bf16.msra.mxu0 0
    %273 = vmatprep.subr.bf16.mxu0 0
    %274 = vmatpush2.bf16.msra.mxu0 0
    %275 = vmatprep.mubr.bf16.mxu0 0
    %276 = vmatmul.mubr.bf16.gmra.mxu0 %v171
    %v277 = vpop.f32.mrf.mxu0
    %v278 = vadd.f32 %v193, %v277
    %v279 = vpop.f32.mrf.mxu0
    %v280 = vpop.f32.mrf.mxu0
    %v281 = vadd.f32 %v193, %v280
    %v282 = vpop.f32.mrf.mxu0
    %283 = vdwg.mxu0
    %v284 = vsub.f32 0.0, %v278
    %v285 = vsub.f32 0.0, %v281
    %v286 = vmul.f32 %v284, 1.442695
    %v287 = vpow.pop %v286
    %v288 = vmul.f32 %v285, 1.442695
    %v289 = vpow.pop %v288
    %v290 = vadd.f32 %v287, 1.0
    %v291 = vadd.f32 %v289, 1.0
    %v292 = vrcp.pop %v290
    %v293 = vmul.f32 1.0, %v292
    %v294 = vrcp.pop %v291
    %v295 = vmul.f32 1.0, %v294
    %296 = vst [vmem:[%s5] sm:$0xff] %v293
    %297 = vst [vmem:[%s5 + $0x8] sm:$0xff] %v295
    // Predicated region
    $region30: #{_forward_impl.1} parent=1 // pred_check
      _
    $region31: #{_forward_impl.1} parent=1 // pred_check_branch
      %299 = sbr.rel (0) target = $region33
    $region32: #{_forward_impl.1} parent=1 // pred_region
      _
    $region33: #{_forward_impl.1} parent=1 // pred_fallthru
      _
    // Predicated region
    $region34: #{_forward_impl.1} parent=1 // pred_check
      _
    $region35: #{_forward_impl.1} parent=1 // pred_check_branch
      %301 = sbr.rel (0) target = $region37
    $region36: #{_forward_impl.1} parent=1 // pred_region
      _
    $region37: #{_forward_impl.1} parent=1 // pred_fallthru
      _
    %302 = vsyncpa [#allocation3], 1
    %303 = vsyncpa [#allocation5], 1

// kernel: _forward_impl.1
$region0: #{_forward_impl.1}
  #allocation0 [shape = 'u32[]', space=smem, size = 0x4, offset = 0x4, fixed_abs, tag = 'smem constant byte address 0x4 - core index']
  #allocation1 [shape = 'u32[144,128]{1,0:T(1,128)}', space=vmem, size = 0x12000, scoped, tag = 'internal scratch']
  %s0 = inlined_call_operand.vmem [shape: bf16[16,128], index: 0, kind: input, shape index: {}]
  %s1 = inlined_call_operand.hbm [shape: bf16[128,128], index: 1, kind: input, shape index: {}]
  %s2 = inlined_call_operand.vmem [shape: f32[1,128], index: 2, kind: input, shape index: {}]
  %s3 = inlined_call_operand.hbm [shape: bf16[128,128], index: 3, kind: input, shape index: {}]
  %s4 = inlined_call_operand.vmem [shape: f32[1,128], index: 4, kind: input, shape index: {}]
  %s5 = inlined_call_operand.vmem [shape: f32[16,128], index: 5, kind: output, shape index: {}]
  %s6 = sld [smem:[#allocation0]]
  $region38: #{_forward_impl.1} parent=0
    _
  %s8 = ssub.s32 1, %s6
  %s9 = scalar_select 0, %s8, %s6
  $region1: #{_forward_impl.1} parent=0
    #allocation2 [shape = 'u8[32768]{0}', space=vmem, size = 0x8000, scoped, tag = 'input window, operand 1, single buffered']
    #allocation3 [shape = 's32[1]{0}', space=sflag, size = 0x4, scoped, tag = 'scoped memory for _forward_impl.1']
    #allocation4 [shape = 'u8[32768]{0}', space=vmem, size = 0x8000, scoped, tag = 'input window, operand 3, single buffered']
    #allocation5 [shape = 's32[1]{0}', space=sflag, size = 0x4, scoped, tag = 'scoped memory for _forward_impl.1']
    %10 = vsyncpa [#allocation3], 0
    %11 = vsyncpa [#allocation5], 0
    // Predicated region
    $region2: #{_forward_impl.1} parent=1 // pred_check
      _
    $region3: #{_forward_impl.1} parent=1 // pred_check_branch
      %13 = sbr.rel (0) target = $region5
    $region4: #{_forward_impl.1} parent=1 // pred_region
      _
    $region5: #{_forward_impl.1} parent=1 // pred_fallthru
      _
    // Predicated region
    $region6: #{_forward_impl.1} parent=1 // pred_check
      _
    $region7: #{_forward_impl.1} parent=1 // pred_check_branch
      %15 = sbr.rel (0) target = $region9
    $region8: #{_forward_impl.1} parent=1 // pred_region
      %s17 = ssub.s32 1024, 1024
      %18 = vsyncadd [#allocation3], %s17
      %s19 = sshll.u32 [#allocation2], 4
      %s20 = int_to_ptr.vmem [resolvable:$true] %s19
      %25 = dma.hbm_to_vmem [thread:$0]  %s1, 1024, %s20, [#allocation3], 64, 64, 4
    $region9: #{_forward_impl.1} parent=1 // pred_fallthru
      _
    // Predicated region
    $region10: #{_forward_impl.1} parent=1 // pred_check
      _
    $region11: #{_forward_impl.1} parent=1 // pred_check_branch
      %27 = sbr.rel (0) target = $region13
    $region12: #{_forward_impl.1} parent=1 // pred_region
      _
    $region13: #{_forward_impl.1} parent=1 // pred_fallthru
      _
    // Predicated region
    $region14: #{_forward_impl.1} parent=1 // pred_check
      _
    $region15: #{_forward_impl.1} parent=1 // pred_check_branch
      %29 = sbr.rel (0) target = $region17
    $region16: #{_forward_impl.1} parent=1 // pred_region
      %s31 = ssub.s32 1024, 1024
      %32 = vsyncadd [#allocation5], %s31
      %s33 = sshll.u32 [#allocation4], 4
      %s34 = int_to_ptr.vmem [resolvable:$true] %s33
      %39 = dma.hbm_to_vmem [thread:$0]  %s3, 1024, %s34, [#allocation5], 64, 64, 4
    $region17: #{_forward_impl.1} parent=1 // pred_fallthru
      _
    // Predicated region
    $region18: #{_forward_impl.1} parent=1 // pred_check
      _
    $region19: #{_forward_impl.1} parent=1 // pred_check_branch
      %41 = sbr.rel (0) target = $region21
    $region20: #{_forward_impl.1} parent=1 // pred_region
      _
    $region21: #{_forward_impl.1} parent=1 // pred_fallthru
      _
    // Predicated region
    $region22: #{_forward_impl.1} parent=1 // pred_check
      _
    $region23: #{_forward_impl.1} parent=1 // pred_check_branch
      %43 = sbr.rel (0) target = $region25
    $region24: #{_forward_impl.1} parent=1 // pred_region
      %44 = dma.done [#allocation3], 1024
    $region25: #{_forward_impl.1} parent=1 // pred_fallthru
      _
    // Predicated region
    $region26: #{_forward_impl.1} parent=1 // pred_check
      _
    $region27: #{_forward_impl.1} parent=1 // pred_check_branch
      %46 = sbr.rel (0) target = $region29
    $region28: #{_forward_impl.1} parent=1 // pred_region
      %47 = dma.done [#allocation5], 1024
    $region29: #{_forward_impl.1} parent=1 // pred_fallthru
      _
    %v49 = vld [vmem:[%s0] sm:$0xf]
    %v50 = vld [vmem:[%s0 + $0x4] sm:$0xf]
    %v51 = vld [vmem:[#allocation2] sm:$0xf]
    %v52 = vld [vmem:[#allocation2 + $0x4] sm:$0xf]
    %v53 = vld [vmem:[#allocation2 + $0x8] sm:$0xf]
    %v54 = vld [vmem:[#allocation2 + $0xc] sm:$0xf]
    %v55 = vld [vmem:[#allocation2 + $0x10] sm:$0xf]
    %v56 = vld [vmem:[#allocation2 + $0x14] sm:$0xf]
    %v57 = vld [vmem:[#allocation2 + $0x18] sm:$0xf]
    %v58 = vld [vmem:[#allocation2 + $0x1c] sm:$0xf]
    %v59 = vld [vmem:[#allocation2 + $0x20] sm:$0xf]
    %v60 = vld [vmem:[#allocation2 + $0x24] sm:$0xf]
    %v61 = vld [vmem:[#allocation2 + $0x28] sm:$0xf]
    %v62 = vld [vmem:[#allocation2 + $0x2c] sm:$0xf]
    %v63 = vld [vmem:[#allocation2 + $0x30] sm:$0xf]
    %v64 = vld [vmem:[#allocation2 + $0x34] sm:$0xf]
    %v65 = vld [vmem:[#allocation2 + $0x38] sm:$0xf]
    %v66 = vld [vmem:[#allocation2 + $0x3c] sm:$0xf]
    %v67 = vld [vmem:[%s2] sm:$0x1]
    %v69 = vlaneseq
    %v70 = vshrl.u32 %v69, 7
    %v71 = vsub.s32 0, %v70
    %v72 = vrot.slane %v67, %v71
    %v76 = vunpack.c.l.b16 %v49
    %v77 = vunpack.c.l.b16 %v50
    %v78 = vpack.c.b16 %v77, %v76
    %v96 = vunpack.c.l.b16 %v51
    %v97 = vunpack.c.l.b16 %v52
    %v98 = vunpack.c.l.b16 %v53
    %v99 = vunpack.c.l.b16 %v54
    %v100 = vunpack.c.l.b16 %v55
    %v101 = vunpack.c.l.b16 %v56
    %v102 = vunpack.c.l.b16 %v57
    %v103 = vunpack.c.l.b16 %v58
    %v104 = vunpack.c.l.b16 %v59
    %v105 = vunpack.c.l.b16 %v60
    %v106 = vunpack.c.l.b16 %v61
    %v107 = vunpack.c.l.b16 %v62
    %v108 = vunpack.c.l.b16 %v63
    %v109 = vunpack.c.l.b16 %v64
    %v110 = vunpack.c.l.b16 %v65
    %v111 = vunpack.c.l.b16 %v66
    %v112 = vpack.c.b16 %v97, %v96
    %v113 = vpack.c.b16 %v99, %v98
    %v114 = vpack.c.b16 %v101, %v100
    %v115 = vpack.c.b16 %v103, %v102
    %v116 = vpack.c.b16 %v105, %v104
    %v117 = vpack.c.b16 %v107, %v106
    %v118 = vpack.c.b16 %v109, %v108
    %v119 = vpack.c.b16 %v111, %v110
    %128 = vmatprep.subr.bf16.mxu0 0
    %129 = vmatpush1.bf16.msra.mxu0 %v119
    %130 = vmatprep.subr.bf16.mxu0 0
    %131 = vmatpush1.bf16.msra.mxu0 %v118
    %132 = vmatprep.subr.bf16.mxu0 0
    %133 = vmatpush1.bf16.msra.mxu0 %v117
    %134 = vmatprep.subr.bf16.mxu0 0
    %135 = vmatpush1.bf16.msra.mxu0 %v116
    %136 = vmatprep.subr.bf16.mxu0 0
    %137 = vmatpush1.bf16.msra.mxu0 %v115
    %138 = vmatprep.subr.bf16.mxu0 0
    %139 = vmatpush1.bf16.msra.mxu0 %v114
    %140 = vmatprep.subr.bf16.mxu0 0
    %141 = vmatpush1.bf16.msra.mxu0 %v113
    %142 = vmatprep.subr.bf16.mxu0 0
    %143 = vmatpush1.bf16.msra.mxu0 %v112
    %144 = vmatprep.subr.bf16.mxu0 0
    %145 = vmatpush2.bf16.msra.mxu0 0
    %146 = vmatprep.subr.bf16.mxu0 0
    %147 = vmatpush2.bf16.msra.mxu0 0
    %148 = vmatprep.subr.bf16.mxu0 0
    %149 = vmatpush2.bf16.msra.mxu0 0
    %150 = vmatprep.subr.bf16.mxu0 0
    %151 = vmatpush2.bf16.msra.mxu0 0
    %152 = vmatprep.subr.bf16.mxu0 0
    %153 = vmatpush2.bf16.msra.mxu0 0
    %154 = vmatprep.subr.bf16.mxu0 0
    %155 = vmatpush2.bf16.msra.mxu0 0
    %156 = vmatprep.subr.bf16.mxu0 0
    %157 = vmatpush2.bf16.msra.mxu0 0
    %158 = vmatprep.subr.bf16.mxu0 0
    %159 = vmatpush2.bf16.msra.mxu0 0
    %160 = vmatprep.mubr.bf16.mxu0 0
    %161 = vmatmul.mubr.bf16.gmra.mxu0 %v78
    %v162 = vpop.f32.mrf.mxu0
    %v163 = vadd.f32 %v72, %v162
    %v164 = vpop.f32.mrf.mxu0
    %v165 = vpop.f32.mrf.mxu0
    %v166 = vadd.f32 %v72, %v165
    %v167 = vpop.f32.mrf.mxu0
    %168 = vdwg.mxu0
    %v169 = vmax.f32 %v163, 0.0
    %v170 = vmax.f32 %v166, 0.0
    %v171 = vpack.c.bf16 %v170, %v169
    %v172 = vld [vmem:[#allocation4] sm:$0xf]
    %v173 = vld [vmem:[#allocation4 + $0x4] sm:$0xf]
    %v174 = vld [vmem:[#allocation4 + $0x8] sm:$0xf]
    %v175 = vld [vmem:[#allocation4 + $0xc] sm:$0xf]
    %v176 = vld [vmem:[#allocation4 + $0x10] sm:$0xf]
    %v177 = vld [vmem:[#allocation4 + $0x14] sm:$0xf]
    %v178 = vld [vmem:[#allocation4 + $0x18] sm:$0xf]
    %v179 = vld [vmem:[#allocation4 + $0x1c] sm:$0xf]
    %v180 = vld [vmem:[#allocation4 + $0x20] sm:$0xf]
    %v181 = vld [vmem:[#allocation4 + $0x24] sm:$0xf]
    %v182 = vld [vmem:[#allocation4 + $0x28] sm:$0xf]
    %v183 = vld [vmem:[#allocation4 + $0x2c] sm:$0xf]
    %v184 = vld [vmem:[#allocation4 + $0x30] sm:$0xf]
    %v185 = vld [vmem:[#allocation4 + $0x34] sm:$0xf]
    %v186 = vld [vmem:[#allocation4 + $0x38] sm:$0xf]
    %v187 = vld [vmem:[#allocation4 + $0x3c] sm:$0xf]
    %v188 = vld [vmem:[%s4] sm:$0x1]
    %v190 = vlaneseq
    %v191 = vshrl.u32 %v190, 7
    %v192 = vsub.s32 0, %v191
    %v193 = vrot.slane %v188, %v192
    %v211 = vunpack.c.l.b16 %v172
    %v212 = vunpack.c.l.b16 %v173
    %v213 = vunpack.c.l.b16 %v174
    %v214 = vunpack.c.l.b16 %v175
    %v215 = vunpack.c.l.b16 %v176
    %v216 = vunpack.c.l.b16 %v177
    %v217 = vunpack.c.l.b16 %v178
    %v218 = vunpack.c.l.b16 %v179
    %v219 = vunpack.c.l.b16 %v180
    %v220 = vunpack.c.l.b16 %v181
    %v221 = vunpack.c.l.b16 %v182
    %v222 = vunpack.c.l.b16 %v183
    %v223 = vunpack.c.l.b16 %v184
    %v224 = vunpack.c.l.b16 %v185
    %v225 = vunpack.c.l.b16 %v186
    %v226 = vunpack.c.l.b16 %v187
    %v227 = vpack.c.b16 %v212, %v211
    %v228 = vpack.c.b16 %v214, %v213
    %v229 = vpack.c.b16 %v216, %v215
    %v230 = vpack.c.b16 %v218, %v217
    %v231 = vpack.c.b16 %v220, %v219
    %v232 = vpack.c.b16 %v222, %v221
    %v233 = vpack.c.b16 %v224, %v223
    %v234 = vpack.c.b16 %v226, %v225
    %243 = vmatprep.subr.bf16.mxu0 0
    %244 = vmatpush1.bf16.msra.mxu0 %v234
    %245 = vmatprep.subr.bf16.mxu0 0
    %246 = vmatpush1.bf16.msra.mxu0 %v233
    %247 = vmatprep.subr.bf16.mxu0 0
    %248 = vmatpush1.bf16.msra.mxu0 %v232
    %249 = vmatprep.subr.bf16.mxu0 0
    %250 = vmatpush1.bf16.msra.mxu0 %v231
    %251 = vmatprep.subr.bf16.mxu0 0
    %252 = vmatpush1.bf16.msra.mxu0 %v230
    %253 = vmatprep.subr.bf16.mxu0 0
    %254 = vmatpush1.bf16.msra.mxu0 %v229
    %255 = vmatprep.subr.bf16.mxu0 0
    %256 = vmatpush1.bf16.msra.mxu0 %v228
    %257 = vmatprep.subr.bf16.mxu0 0
    %258 = vmatpush1.bf16.msra.mxu0 %v227
    %259 = vmatprep.subr.bf16.mxu0 0
    %260 = vmatpush2.bf16.msra.mxu0 0
    %261 = vmatprep.subr.bf16.mxu0 0
    %262 = vmatpush2.bf16.msra.mxu0 0
    %263 = vmatprep.subr.bf16.mxu0 0
    %264 = vmatpush2.bf16.msra.mxu0 0
    %265 = vmatprep.subr.bf16.mxu0 0
    %266 = vmatpush2.bf16.msra.mxu0 0
    %267 = vmatprep.subr.bf16.mxu0 0
    %268 = vmatpush2.bf16.msra.mxu0 0
    %269 = vmatprep.subr.bf16.mxu0 0
    %270 = vmatpush2.bf16.msra.mxu0 0
    %271 = vmatprep.subr.bf16.mxu0 0
    %272 = vmatpush2.bf16.msra.mxu0 0
    %273 = vmatprep.subr.bf16.mxu0 0
    %274 = vmatpush2.bf16.msra.mxu0 0
    %275 = vmatprep.mubr.bf16.mxu0 0
    %276 = vmatmul.mubr.bf16.gmra.mxu0 %v171
    %v277 = vpop.f32.mrf.mxu0
    %v278 = vadd.f32 %v193, %v277
    %v279 = vpop.f32.mrf.mxu0
    %v280 = vpop.f32.mrf.mxu0
    %v281 = vadd.f32 %v193, %v280
    %v282 = vpop.f32.mrf.mxu0
    %283 = vdwg.mxu0
    %v284 = vsub.f32 0.0, %v278
    %v285 = vsub.f32 0.0, %v281
    %v286 = vmul.f32 %v284, 1.442695
    %v287 = vpow.pop %v286
    %v288 = vmul.f32 %v285, 1.442695
    %v289 = vpow.pop %v288
    %v290 = vadd.f32 %v287, 1.0
    %v291 = vadd.f32 %v289, 1.0
    %v292 = vrcp.pop %v290
    %v293 = vmul.f32 1.0, %v292
    %v294 = vrcp.pop %v291
    %v295 = vmul.f32 1.0, %v294
    %296 = vst [vmem:[%s5] sm:$0xff] %v293
    %297 = vst [vmem:[%s5 + $0x8] sm:$0xff] %v295
    // Predicated region
    $region30: #{_forward_impl.1} parent=1 // pred_check
      _
    $region31: #{_forward_impl.1} parent=1 // pred_check_branch
      %299 = sbr.rel (0) target = $region33
    $region32: #{_forward_impl.1} parent=1 // pred_region
      _
    $region33: #{_forward_impl.1} parent=1 // pred_fallthru
      _
    // Predicated region
    $region34: #{_forward_impl.1} parent=1 // pred_check
      _
    $region35: #{_forward_impl.1} parent=1 // pred_check_branch
      %301 = sbr.rel (0) target = $region37
    $region36: #{_forward_impl.1} parent=1 // pred_region
      _
    $region37: #{_forward_impl.1} parent=1 // pred_fallthru
      _
    %302 = vsyncpa [#allocation3], 1
    %303 = vsyncpa [#allocation5], 1

</llo_original>
